<compile_context>
chip_gen: v7x
topology: tpu7x:2x2x1
jax: 0.10.0
libtpu: 0.0.40
codegen_flags: <defaults>
</compile_context>

<pallas_src>
import jax
import jax.numpy as jnp
from jax.experimental import pallas as pl
from jax.experimental.pallas import tpu as pltpu


def _round_up(n, m):
    return ((n + m - 1) // m) * m


def autoencoder_kernel(
    xT_ref,
    we1_ref, be1_ref,
    we2_ref, be2_ref,
    wf_ref, bf_ref,           # fused (wd1 @ we3), (wd1 @ be3 + bd1)
    wd2_ref, bd2_ref,
    wd3_ref, bd3_ref,
    outT_ref,
):
    x = xT_ref[...]                                           # (F, TB)

    # ---- Encoder ----
    h = jnp.tanh(
        jnp.dot(we1_ref[...], x, preferred_element_type=jnp.float32) + be1_ref[...]
    )                                                         # (h1, TB)
    h = jnp.tanh(
        jnp.dot(we2_ref[...], h, preferred_element_type=jnp.float32) + be2_ref[...]
    )                                                         # (h2, TB)

    # ---- Bottleneck: encoder L3 + decoder L1 fused (no nonlinearity between) ----
    h = jnp.tanh(
        jnp.dot(wf_ref[...], h, preferred_element_type=jnp.float32) + bf_ref[...]
    )                                                         # (h2, TB)

    # ---- Decoder ----
    h = jnp.tanh(
        jnp.dot(wd2_ref[...], h, preferred_element_type=jnp.float32) + bd2_ref[...]
    )                                                         # (h1, TB)
    out = jnp.dot(wd3_ref[...], h, preferred_element_type=jnp.float32) + bd3_ref[...]

    outT_ref[...] = out.astype(outT_ref.dtype)                # (F, TB)


def init_linear(key, in_f, out_f):
    """PyTorch nn.Linear default init: U(-1/sqrt(in_f), 1/sqrt(in_f))."""
    kw, kb = jax.random.split(key)
    bound = 1.0 / jnp.sqrt(jnp.float32(in_f))
    w = jax.random.uniform(kw, (out_f, in_f), jnp.float32, -bound, bound)
    b = jax.random.uniform(kb, (out_f, 1), jnp.float32, -bound, bound)
    return w, b


def make_autoencoder_params(key, input_size, output_size):
    h1 = input_size // 2
    h2 = input_size // 4
    keys = jax.random.split(key, 6)
    we1, be1 = init_linear(keys[0], input_size, h1)
    we2, be2 = init_linear(keys[1], h1, h2)
    we3, be3 = init_linear(keys[2], h2, output_size)
    wd1, bd1 = init_linear(keys[3], output_size, h2)
    wd2, bd2 = init_linear(keys[4], h2, h1)
    wd3, bd3 = init_linear(keys[5], h1, input_size)
    return (we1, be1, we2, be2, we3, be3, wd1, bd1, wd2, bd2, wd3, bd3)


def prepare_kernel_params(params):
    """Fuse encoder L3 / decoder L1 (mathematically equivalent, fp reassoc only)."""
    (we1, be1, we2, be2, we3, be3, wd1, bd1, wd2, bd2, wd3, bd3) = params
    wf = wd1 @ we3               # (h2, out) @ (out, h2) -> (h2, h2)
    bf = wd1 @ be3 + bd1         # (h2, 1)
    return (we1, be1, we2, be2, wf, bf, wd2, bd2, wd3, bd3)


def autoencoder_forward(x, params, *, block_b=512):
    B, F = x.shape
    kparams = prepare_kernel_params(params)

    # Batch tile on the lane (last) axis: a multiple of 128, capped at block_b.
    TB = min(block_b, _round_up(B, 128))
    Bp = _round_up(B, TB)

    xT = jnp.transpose(x)                      # (F, B): batch on lanes
    if Bp != B:
        xT = jnp.pad(xT, ((0, 0), (0, Bp - B)))

    def act_spec():
        return pl.BlockSpec((F, TB), lambda j: (0, j))

    def wspec(a):                              # full array, VMEM-resident
        return pl.BlockSpec(a.shape, lambda j: (0, 0))

    outT = pl.pallas_call(
        autoencoder_kernel,
        out_shape=jax.ShapeDtypeStruct((F, Bp), jnp.float32),
        grid=(Bp // TB,),
        in_specs=[act_spec()] + [wspec(p) for p in kparams],
        out_specs=act_spec(),
        compiler_params=pltpu.CompilerParams(
            dimension_semantics=("parallel",),
        ),
    )(xT, *kparams)

    return jnp.transpose(outT[:, :B])          # back to (B, F)


def reference_forward(x, params):
    """Pure-JAX reference in PyTorch orientation (unfused)."""
    (we1, be1, we2, be2, we3, be3, wd1, bd1, wd2, bd2, wd3, bd3) = params
    h = jnp.tanh(x @ we1.T + be1.T)
    h = jnp.tanh(h @ we2.T + be2.T)
    z = h @ we3.T + be3.T
    h = jnp.tanh(z @ wd1.T + bd1.T)
    h = jnp.tanh(h @ wd2.T + bd2.T)
    return h @ wd3.T + bd3.T


if __name__ == "__main__":
    # Small shapes consistent with the module: x is (batch, input_size).
    batch = 8
    input_size = 32
    output_size = 8

    key = jax.random.PRNGKey(0)
    kx, kp = jax.random.split(key)
    x = jax.random.normal(kx, (batch, input_size), jnp.float32)
    params = make_autoencoder_params(kp, input_size, output_size)

    out = autoencoder_forward(x, params)
    out = jax.block_until_ready(out)
    ref = reference_forward(x, params)
    assert out.shape == (batch, input_size)
    assert jnp.allclose(out, ref, atol=2e-5, rtol=2e-5), "mismatch vs reference"

    # Exercise the batch-gridded / padded path (grid > 1, B not a tile multiple).
    xb = jax.random.normal(kx, (600, input_size), jnp.float32)
    outb = jax.block_until_ready(autoencoder_forward(xb, params))
    refb = reference_forward(xb, params)
    assert outb.shape == (600, input_size)
    assert jnp.allclose(outb, refb, atol=2e-5, rtol=2e-5), "mismatch (large batch)"

    print("KERNEL_OK")
</pallas_src>

<mosaic_0001>
module attributes {stable_mosaic.version = 11 : i64} {
  func.func @autoencoder_kernel(%arg0: i32, %arg1: memref<32x128xf32, #tpu.memory_space<vmem>>, %arg2: memref<16x32xf32, #tpu.memory_space<vmem>>, %arg3: memref<16x1xf32, #tpu.memory_space<vmem>>, %arg4: memref<8x16xf32, #tpu.memory_space<vmem>>, %arg5: memref<8x1xf32, #tpu.memory_space<vmem>>, %arg6: memref<8x8xf32, #tpu.memory_space<vmem>>, %arg7: memref<8x1xf32, #tpu.memory_space<vmem>>, %arg8: memref<16x8xf32, #tpu.memory_space<vmem>>, %arg9: memref<16x1xf32, #tpu.memory_space<vmem>>, %arg10: memref<32x16xf32, #tpu.memory_space<vmem>>, %arg11: memref<32x1xf32, #tpu.memory_space<vmem>>, %arg12: memref<32x128xf32, #tpu.memory_space<vmem>>) attributes {dimension_semantics = [#tpu.dimension_semantics<parallel>], iteration_bounds = array<i64: 1>, scalar_prefetch = 0 : i64, scratch_operands = 0 : i64, tpu.core_type = #tpu.core_type<tc>, window_params = [{transform_indices = @transform_0, window_bounds = array<i64: 32, 128>}, {pipeline_mode = #tpu.pipeline_mode<synchronous>, transform_indices = @transform_1, window_bounds = array<i64: 16, 32>}, {pipeline_mode = #tpu.pipeline_mode<synchronous>, transform_indices = @transform_2, window_bounds = array<i64: 16, 1>}, {pipeline_mode = #tpu.pipeline_mode<synchronous>, transform_indices = @transform_3, window_bounds = array<i64: 8, 16>}, {pipeline_mode = #tpu.pipeline_mode<synchronous>, transform_indices = @transform_4, window_bounds = array<i64: 8, 1>}, {pipeline_mode = #tpu.pipeline_mode<synchronous>, transform_indices = @transform_5, window_bounds = array<i64: 8, 8>}, {pipeline_mode = #tpu.pipeline_mode<synchronous>, transform_indices = @transform_6, window_bounds = array<i64: 8, 1>}, {pipeline_mode = #tpu.pipeline_mode<synchronous>, transform_indices = @transform_7, window_bounds = array<i64: 16, 8>}, {pipeline_mode = #tpu.pipeline_mode<synchronous>, transform_indices = @transform_8, window_bounds = array<i64: 16, 1>}, {pipeline_mode = #tpu.pipeline_mode<synchronous>, transform_indices = @transform_9, window_bounds = array<i64: 32, 16>}, {pipeline_mode = #tpu.pipeline_mode<synchronous>, transform_indices = @transform_10, window_bounds = array<i64: 32, 1>}, {transform_indices = @transform_11, window_bounds = array<i64: 32, 128>}]} {
    %c0 = arith.constant 0 : index
    %c0_0 = arith.constant 0 : index
    %0 = vector.load %arg1[%c0, %c0_0] : memref<32x128xf32, #tpu.memory_space<vmem>>, vector<32x128xf32>
    %c0_1 = arith.constant 0 : index
    %c0_2 = arith.constant 0 : index
    %1 = vector.load %arg2[%c0_1, %c0_2] : memref<16x32xf32, #tpu.memory_space<vmem>>, vector<16x32xf32>
    %cst = arith.constant dense<0.000000e+00> : vector<16x128xf32>
    %2 = tpu.matmul %1, %0, %cst {dimension_numbers = #tpu.dot_dimension_numbers<[1], [0], [0], [1], [0, 0, 1, 1], [], []>} : vector<16x32xf32>, vector<32x128xf32>, vector<16x128xf32> -> vector<16x128xf32>
    %c0_3 = arith.constant 0 : index
    %c0_4 = arith.constant 0 : index
    %3 = vector.load %arg3[%c0_3, %c0_4] : memref<16x1xf32, #tpu.memory_space<vmem>>, vector<16x1xf32>
    %4 = vector.broadcast %3 : vector<16x1xf32> to vector<16x128xf32>
    %5 = arith.addf %2, %4 : vector<16x128xf32>
    %6 = math.tanh %5 : vector<16x128xf32>
    %c0_5 = arith.constant 0 : index
    %c0_6 = arith.constant 0 : index
    %7 = vector.load %arg4[%c0_5, %c0_6] : memref<8x16xf32, #tpu.memory_space<vmem>>, vector<8x16xf32>
    %cst_7 = arith.constant dense<0.000000e+00> : vector<8x128xf32>
    %8 = tpu.matmul %7, %6, %cst_7 {dimension_numbers = #tpu.dot_dimension_numbers<[1], [0], [0], [1], [0, 0, 1, 1], [], []>} : vector<8x16xf32>, vector<16x128xf32>, vector<8x128xf32> -> vector<8x128xf32>
    %c0_8 = arith.constant 0 : index
    %c0_9 = arith.constant 0 : index
    %9 = vector.load %arg5[%c0_8, %c0_9] : memref<8x1xf32, #tpu.memory_space<vmem>>, vector<8x1xf32>
    %10 = vector.broadcast %9 : vector<8x1xf32> to vector<8x128xf32>
    %11 = arith.addf %8, %10 : vector<8x128xf32>
    %12 = math.tanh %11 : vector<8x128xf32>
    %c0_10 = arith.constant 0 : index
    %c0_11 = arith.constant 0 : index
    %13 = vector.load %arg6[%c0_10, %c0_11] : memref<8x8xf32, #tpu.memory_space<vmem>>, vector<8x8xf32>
    %cst_12 = arith.constant dense<0.000000e+00> : vector<8x128xf32>
    %14 = tpu.matmul %13, %12, %cst_12 {dimension_numbers = #tpu.dot_dimension_numbers<[1], [0], [0], [1], [0, 0, 1, 1], [], []>} : vector<8x8xf32>, vector<8x128xf32>, vector<8x128xf32> -> vector<8x128xf32>
    %c0_13 = arith.constant 0 : index
    %c0_14 = arith.constant 0 : index
    %15 = vector.load %arg7[%c0_13, %c0_14] : memref<8x1xf32, #tpu.memory_space<vmem>>, vector<8x1xf32>
    %16 = vector.broadcast %15 : vector<8x1xf32> to vector<8x128xf32>
    %17 = arith.addf %14, %16 : vector<8x128xf32>
    %18 = math.tanh %17 : vector<8x128xf32>
    %c0_15 = arith.constant 0 : index
    %c0_16 = arith.constant 0 : index
    %19 = vector.load %arg8[%c0_15, %c0_16] : memref<16x8xf32, #tpu.memory_space<vmem>>, vector<16x8xf32>
    %cst_17 = arith.constant dense<0.000000e+00> : vector<16x128xf32>
    %20 = tpu.matmul %19, %18, %cst_17 {dimension_numbers = #tpu.dot_dimension_numbers<[1], [0], [0], [1], [0, 0, 1, 1], [], []>} : vector<16x8xf32>, vector<8x128xf32>, vector<16x128xf32> -> vector<16x128xf32>
    %c0_18 = arith.constant 0 : index
    %c0_19 = arith.constant 0 : index
    %21 = vector.load %arg9[%c0_18, %c0_19] : memref<16x1xf32, #tpu.memory_space<vmem>>, vector<16x1xf32>
    %22 = vector.broadcast %21 : vector<16x1xf32> to vector<16x128xf32>
    %23 = arith.addf %20, %22 : vector<16x128xf32>
    %24 = math.tanh %23 : vector<16x128xf32>
    %c0_20 = arith.constant 0 : index
    %c0_21 = arith.constant 0 : index
    %25 = vector.load %arg10[%c0_20, %c0_21] : memref<32x16xf32, #tpu.memory_space<vmem>>, vector<32x16xf32>
    %cst_22 = arith.constant dense<0.000000e+00> : vector<32x128xf32>
    %26 = tpu.matmul %25, %24, %cst_22 {dimension_numbers = #tpu.dot_dimension_numbers<[1], [0], [0], [1], [0, 0, 1, 1], [], []>} : vector<32x16xf32>, vector<16x128xf32>, vector<32x128xf32> -> vector<32x128xf32>
    %c0_23 = arith.constant 0 : index
    %c0_24 = arith.constant 0 : index
    %27 = vector.load %arg11[%c0_23, %c0_24] : memref<32x1xf32, #tpu.memory_space<vmem>>, vector<32x1xf32>
    %28 = vector.broadcast %27 : vector<32x1xf32> to vector<32x128xf32>
    %29 = arith.addf %26, %28 : vector<32x128xf32>
    %c0_25 = arith.constant 0 : index
    %c0_26 = arith.constant 0 : index
    %30 = vector.load %arg12[%c0_25, %c0_26] : memref<32x128xf32, #tpu.memory_space<vmem>>, vector<32x128xf32>
    tpu.vector_store %arg12[%c0_25, %c0_26], %29 {strides = array<i32>} : memref<32x128xf32, #tpu.memory_space<vmem>>, vector<32x128xf32>,
    return
  }
  func.func @transform_0(%arg0: i32) -> (i32, i32) {
    %c0_i32 = arith.constant 0 : i32
    %c0_i32_0 = arith.constant 0 : i32
    return %c0_i32, %arg0 : i32, i32
  }
  func.func @transform_1(%arg0: i32) -> (i32, i32) {
    %c0_i32 = arith.constant 0 : i32
    %c0_i32_0 = arith.constant 0 : i32
    %c0_i32_1 = arith.constant 0 : i32
    return %c0_i32, %c0_i32_0 : i32, i32
  }
  func.func @transform_2(%arg0: i32) -> (i32, i32) {
    %c0_i32 = arith.constant 0 : i32
    %c0_i32_0 = arith.constant 0 : i32
    %c0_i32_1 = arith.constant 0 : i32
    return %c0_i32, %c0_i32_0 : i32, i32
  }
  func.func @transform_3(%arg0: i32) -> (i32, i32) {
    %c0_i32 = arith.constant 0 : i32
    %c0_i32_0 = arith.constant 0 : i32
    %c0_i32_1 = arith.constant 0 : i32
    return %c0_i32, %c0_i32_0 : i32, i32
  }
  func.func @transform_4(%arg0: i32) -> (i32, i32) {
    %c0_i32 = arith.constant 0 : i32
    %c0_i32_0 = arith.constant 0 : i32
    %c0_i32_1 = arith.constant 0 : i32
    return %c0_i32, %c0_i32_0 : i32, i32
  }
  func.func @transform_5(%arg0: i32) -> (i32, i32) {
    %c0_i32 = arith.constant 0 : i32
    %c0_i32_0 = arith.constant 0 : i32
    %c0_i32_1 = arith.constant 0 : i32
    return %c0_i32, %c0_i32_0 : i32, i32
  }
  func.func @transform_6(%arg0: i32) -> (i32, i32) {
    %c0_i32 = arith.constant 0 : i32
    %c0_i32_0 = arith.constant 0 : i32
    %c0_i32_1 = arith.constant 0 : i32
    return %c0_i32, %c0_i32_0 : i32, i32
  }
  func.func @transform_7(%arg0: i32) -> (i32, i32) {
    %c0_i32 = arith.constant 0 : i32
    %c0_i32_0 = arith.constant 0 : i32
    %c0_i32_1 = arith.constant 0 : i32
    return %c0_i32, %c0_i32_0 : i32, i32
  }
  func.func @transform_8(%arg0: i32) -> (i32, i32) {
    %c0_i32 = arith.constant 0 : i32
    %c0_i32_0 = arith.constant 0 : i32
    %c0_i32_1 = arith.constant 0 : i32
    return %c0_i32, %c0_i32_0 : i32, i32
  }
  func.func @transform_9(%arg0: i32) -> (i32, i32) {
    %c0_i32 = arith.constant 0 : i32
    %c0_i32_0 = arith.constant 0 : i32
    %c0_i32_1 = arith.constant 0 : i32
    return %c0_i32, %c0_i32_0 : i32, i32
  }
  func.func @transform_10(%arg0: i32) -> (i32, i32) {
    %c0_i32 = arith.constant 0 : i32
    %c0_i32_0 = arith.constant 0 : i32
    %c0_i32_1 = arith.constant 0 : i32
    return %c0_i32, %c0_i32_0 : i32, i32
  }
  func.func @transform_11(%arg0: i32) -> (i32, i32) {
    %c0_i32 = arith.constant 0 : i32
    %c0_i32_0 = arith.constant 0 : i32
    return %c0_i32, %arg0 : i32, i32
  }
}

</mosaic_0001>

<llo_original>
// kernel: tpu_custom_call.1
$region0: #{tpu_custom_call.1}
  #allocation0 [shape = 'u32[]', space=smem, size = 0x4, offset = 0x4, fixed_abs, tag = 'smem constant byte address 0x4 - core index']
  #allocation1 [shape = 'u32[144,128]{1,0:T(1,128)}', space=vmem, size = 0x12000, scoped, tag = 'internal scratch']
  %s0 = inlined_call_operand.vmem [shape: f32[32,128], index: 0, kind: input, shape index: {}]
  %s1 = inlined_call_operand.vmem [shape: f32[16,32], index: 1, kind: input, shape index: {}]
  %s2 = inlined_call_operand.vmem [shape: f32[16,1], index: 2, kind: input, shape index: {}]
  %s3 = inlined_call_operand.vmem [shape: f32[8,16], index: 3, kind: input, shape index: {}]
  %s4 = inlined_call_operand.vmem [shape: f32[8,1], index: 4, kind: input, shape index: {}]
  %s5 = inlined_call_operand.vmem [shape: f32[8,8], index: 5, kind: input, shape index: {}]
  %s6 = inlined_call_operand.vmem [shape: f32[8,1], index: 6, kind: input, shape index: {}]
  %s7 = inlined_call_operand.vmem [shape: f32[16,8], index: 7, kind: input, shape index: {}]
  %s8 = inlined_call_operand.vmem [shape: f32[16,1], index: 8, kind: input, shape index: {}]
  %s9 = inlined_call_operand.vmem [shape: f32[32,16], index: 9, kind: input, shape index: {}]
  %s10 = inlined_call_operand.vmem [shape: f32[32,1], index: 10, kind: input, shape index: {}]
  %s11 = inlined_call_operand.hbm [shape: f32[32,128], index: 11, kind: output, shape index: {}]
  %s12 = sld [smem:[#allocation0]]
  $region54: #{tpu_custom_call.1} parent=0
    _
  %s14 = ssub.s32 1, %s12
  %s15 = scalar_select 0, %s14, %s12
  $region1: #{tpu_custom_call.1} parent=0
    #allocation2 [shape = 'u8[16384]{0}', space=vmem, size = 0x4000, scoped, tag = 'output window, operand 0, single buffered']
    #allocation3 [shape = 's32[1]{0}', space=sflag, size = 0x4, scoped, tag = 'scoped memory for tpu_custom_call.1']
    %16 = vsyncpa [#allocation3], 0
    // Predicated region
    $region2: #{tpu_custom_call.1} parent=1 // pred_check
      _
    $region3: #{tpu_custom_call.1} parent=1 // pred_check_branch
      %18 = sbr.rel (0) target = $region5
    $region4: #{tpu_custom_call.1} parent=1 // pred_region
      _
    $region5: #{tpu_custom_call.1} parent=1 // pred_fallthru
      _
    // Predicated region
    $region6: #{tpu_custom_call.1} parent=1 // pred_check
      _
    $region7: #{tpu_custom_call.1} parent=1 // pred_check_branch
      %20 = sbr.rel (0) target = $region9
    $region8: #{tpu_custom_call.1} parent=1 // pred_region
      _
    $region9: #{tpu_custom_call.1} parent=1 // pred_fallthru
      _
    // Predicated region
    $region10: #{tpu_custom_call.1} parent=1 // pred_check
      _
    $region11: #{tpu_custom_call.1} parent=1 // pred_check_branch
      %22 = sbr.rel (0) target = $region13
    $region12: #{tpu_custom_call.1} parent=1 // pred_region
      _
    $region13: #{tpu_custom_call.1} parent=1 // pred_fallthru
      _
    // Predicated region
    $region14: #{tpu_custom_call.1} parent=1 // pred_check
      _
    $region15: #{tpu_custom_call.1} parent=1 // pred_check_branch
      %24 = sbr.rel (0) target = $region17
    $region16: #{tpu_custom_call.1} parent=1 // pred_region
      _
    $region17: #{tpu_custom_call.1} parent=1 // pred_fallthru
      _
    // Predicated region
    $region18: #{tpu_custom_call.1} parent=1 // pred_check
      _
    $region19: #{tpu_custom_call.1} parent=1 // pred_check_branch
      %26 = sbr.rel (0) target = $region21
    $region20: #{tpu_custom_call.1} parent=1 // pred_region
      _
    $region21: #{tpu_custom_call.1} parent=1 // pred_fallthru
      _
    // Predicated region
    $region22: #{tpu_custom_call.1} parent=1 // pred_check
      _
    $region23: #{tpu_custom_call.1} parent=1 // pred_check_branch
      %28 = sbr.rel (0) target = $region25
    $region24: #{tpu_custom_call.1} parent=1 // pred_region
      _
    $region25: #{tpu_custom_call.1} parent=1 // pred_fallthru
      _
    // Predicated region
    $region26: #{tpu_custom_call.1} parent=1 // pred_check
      _
    $region27: #{tpu_custom_call.1} parent=1 // pred_check_branch
      %30 = sbr.rel (0) target = $region29
    $region28: #{tpu_custom_call.1} parent=1 // pred_region
      _
    $region29: #{tpu_custom_call.1} parent=1 // pred_fallthru
      _
    // Predicated region
    $region30: #{tpu_custom_call.1} parent=1 // pred_check
      _
    $region31: #{tpu_custom_call.1} parent=1 // pred_check_branch
      %32 = sbr.rel (0) target = $region33
    $region32: #{tpu_custom_call.1} parent=1 // pred_region
      _
    $region33: #{tpu_custom_call.1} parent=1 // pred_fallthru
      _
    // Predicated region
    $region34: #{tpu_custom_call.1} parent=1 // pred_check
      _
    $region35: #{tpu_custom_call.1} parent=1 // pred_check_branch
      %34 = sbr.rel (0) target = $region37
    $region36: #{tpu_custom_call.1} parent=1 // pred_region
      _
    $region37: #{tpu_custom_call.1} parent=1 // pred_fallthru
      _
    // Predicated region
    $region38: #{tpu_custom_call.1} parent=1 // pred_check
      _
    $region39: #{tpu_custom_call.1} parent=1 // pred_check_branch
      %36 = sbr.rel (0) target = $region41
    $region40: #{tpu_custom_call.1} parent=1 // pred_region
      _
    $region41: #{tpu_custom_call.1} parent=1 // pred_fallthru
      _
    // Predicated region
    $region42: #{tpu_custom_call.1} parent=1 // pred_check
      _
    $region43: #{tpu_custom_call.1} parent=1 // pred_check_branch
      %38 = sbr.rel (0) target = $region45
    $region44: #{tpu_custom_call.1} parent=1 // pred_region
      _
    $region45: #{tpu_custom_call.1} parent=1 // pred_fallthru
      _
    %v39 = vld [vmem:[%s0] sm:$0xff]
    %v40 = vld [vmem:[%s0 + $0x8] sm:$0xff]
    %v41 = vld [vmem:[%s0 + $0x10] sm:$0xff]
    %v42 = vld [vmem:[%s0 + $0x18] sm:$0xff]
    %v43 = vld [vmem:[%s1] sm:$0xff]
    %v44 = vld [vmem:[%s1 + $0x8] sm:$0xff]
    %v45 = vld [vmem:[%s2] sm:$0xff]
    %v46 = vld [vmem:[%s2 + $0x8] sm:$0xff]
    %48 = vset.pattern.permute.xlu0 0
    %49 = vperm.xlu0 %48, %v45
    %v50 = vpop.permute.xlu0 %49
    %53 = vset.pattern.permute.xlu0 0
    %54 = vperm.xlu0 %53, %v46
    %v55 = vpop.permute.xlu0 %54
    %vm57 = vcmask 261120
    %v59 = vsel %vm57, %v43, 0
    %v62 = vsel %vm57, %v44, 0
    %64 = vmatprep.subr.mxu0 0.0
    %65 = vmatpush1.msra.mxu0 %v39
    %66 = vmatprep.subr.mxu0 0.0
    %67 = vmatpush1.msra.mxu0 %v40
    %68 = vmatprep.subr.mxu0 0.0
    %69 = vmatpush1.msra.mxu0 %v41
    %70 = vmatprep.subr.mxu0 0.0
    %71 = vmatpush1.msra.mxu0 %v42
    %72 = vmatprep.subr.mxu0 0.0
    %73 = vmatpush1.msra.mxu0 0.0
    %74 = vmatprep.subr.mxu0 0.0
    %75 = vmatpush1.msra.mxu0 0.0
    %76 = vmatprep.subr.mxu0 0.0
    %77 = vmatpush1.msra.mxu0 0.0
    %78 = vmatprep.subr.mxu0 0.0
    %79 = vmatpush1.msra.mxu0 0.0
    %80 = vmatprep.subr.mxu0 0.0
    %81 = vmatpush1.msra.mxu0 0.0
    %82 = vmatprep.subr.mxu0 0.0
    %83 = vmatpush1.msra.mxu0 0.0
    %84 = vmatprep.subr.mxu0 0.0
    %85 = vmatpush1.msra.mxu0 0.0
    %86 = vmatprep.subr.mxu0 0.0
    %87 = vmatpush1.msra.mxu0 0.0
    %88 = vmatprep.subr.mxu0 0.0
    %89 = vmatpush1.msra.mxu0 0.0
    %90 = vmatprep.subr.mxu0 0.0
    %91 = vmatpush1.msra.mxu0 0.0
    %92 = vmatprep.subr.mxu0 0.0
    %93 = vmatpush1.msra.mxu0 0.0
    %94 = vmatprep.subr.mxu0 0.0
    %95 = vmatpush1.msra.mxu0 0.0
    %96 = vmatprep.subr.mxu0 0.0
    %97 = vmatpush1.msra.mxu0 0.0
    %98 = vmatprep.subr.mxu0 0.0
    %99 = vmatpush1.msra.mxu0 0.0
    %100 = vmatprep.subr.mxu0 0.0
    %101 = vmatpush1.msra.mxu0 0.0
    %102 = vmatprep.subr.mxu0 0.0
    %103 = vmatpush1.msra.mxu0 0.0
    %104 = vmatprep.subr.mxu0 0.0
    %105 = vmatpush1.msra.mxu0 0.0
    %106 = vmatprep.subr.mxu0 0.0
    %107 = vmatpush1.msra.mxu0 0.0
    %108 = vmatprep.subr.mxu0 0.0
    %109 = vmatpush1.msra.mxu0 0.0
    %110 = vmatprep.subr.mxu0 0.0
    %111 = vmatpush1.msra.mxu0 0.0
    %112 = vmatprep.subr.mxu0 0.0
    %113 = vmatpush1.msra.mxu0 0.0
    %114 = vmatprep.subr.mxu0 0.0
    %115 = vmatpush1.msra.mxu0 0.0
    %116 = vmatprep.subr.mxu0 0.0
    %117 = vmatpush1.msra.mxu0 0.0
    %118 = vmatprep.subr.mxu0 0.0
    %119 = vmatpush1.msra.mxu0 0.0
    %120 = vmatprep.subr.mxu0 0.0
    %121 = vmatpush1.msra.mxu0 0.0
    %122 = vmatprep.subr.mxu0 0.0
    %123 = vmatpush1.msra.mxu0 0.0
    %124 = vmatprep.subr.mxu0 0.0
    %125 = vmatpush1.msra.mxu0 0.0
    %126 = vmatprep.subr.mxu0 0.0
    %127 = vmatpush1.msra.mxu0 0.0
    %128 = vmatprep.mubr.f32.mxu0 0.0
    %129 = vmatmul.mubr.f32.gmra.mrb[0].mxu0 %v59
    %v130 = vpop.f32.mrb[0].mxu0
    %v131 = vadd.f32 %v50, %v130
    %v132 = vpop.f32.mrb[0].mxu0
    %133 = vmatprep.mubr.f32.mxu0 0.0
    %134 = vmatmul.mubr.f32.gmra.mrb[0].mxu0 %v62
    %v135 = vpop.f32.mrb[0].mxu0
    %v136 = vadd.f32 %v55, %v135
    %v137 = vpop.f32.mrb[0].mxu0
    %138 = vdwg.mxu0
    %v139 = vtanh.pop %v131
    %v140 = vtanh.pop %v136
    %v141 = vld [vmem:[%s3] sm:$0xff]
    %v142 = vld [vmem:[%s4] sm:$0xff]
    %144 = vset.pattern.permute.xlu0 0
    %145 = vperm.xlu0 %144, %v142
    %v146 = vpop.permute.xlu0 %145
    %vm148 = vcmask 130048
    %v150 = vsel %vm148, %v141, 0
    %152 = vmatprep.subr.mxu0 0.0
    %153 = vmatpush1.msra.mxu0 %v139
    %154 = vmatprep.subr.mxu0 0.0
    %155 = vmatpush1.msra.mxu0 %v140
    %156 = vmatprep.subr.mxu0 0.0
    %157 = vmatpush1.msra.mxu0 0.0
    %158 = vmatprep.subr.mxu0 0.0
    %159 = vmatpush1.msra.mxu0 0.0
    %160 = vmatprep.subr.mxu0 0.0
    %161 = vmatpush1.msra.mxu0 0.0
    %162 = vmatprep.subr.mxu0 0.0
    %163 = vmatpush1.msra.mxu0 0.0
    %164 = vmatprep.subr.mxu0 0.0
    %165 = vmatpush1.msra.mxu0 0.0
    %166 = vmatprep.subr.mxu0 0.0
    %167 = vmatpush1.msra.mxu0 0.0
    %168 = vmatprep.subr.mxu0 0.0
    %169 = vmatpush1.msra.mxu0 0.0
    %170 = vmatprep.subr.mxu0 0.0
    %171 = vmatpush1.msra.mxu0 0.0
    %172 = vmatprep.subr.mxu0 0.0
    %173 = vmatpush1.msra.mxu0 0.0
    %174 = vmatprep.subr.mxu0 0.0
    %175 = vmatpush1.msra.mxu0 0.0
    %176 = vmatprep.subr.mxu0 0.0
    %177 = vmatpush1.msra.mxu0 0.0
    %178 = vmatprep.subr.mxu0 0.0
    %179 = vmatpush1.msra.mxu0 0.0
    %180 = vmatprep.subr.mxu0 0.0
    %181 = vmatpush1.msra.mxu0 0.0
    %182 = vmatprep.subr.mxu0 0.0
    %183 = vmatpush1.msra.mxu0 0.0
    %184 = vmatprep.subr.mxu0 0.0
    %185 = vmatpush1.msra.mxu0 0.0
    %186 = vmatprep.subr.mxu0 0.0
    %187 = vmatpush1.msra.mxu0 0.0
    %188 = vmatprep.subr.mxu0 0.0
    %189 = vmatpush1.msra.mxu0 0.0
    %190 = vmatprep.subr.mxu0 0.0
    %191 = vmatpush1.msra.mxu0 0.0
    %192 = vmatprep.subr.mxu0 0.0
    %193 = vmatpush1.msra.mxu0 0.0
    %194 = vmatprep.subr.mxu0 0.0
    %195 = vmatpush1.msra.mxu0 0.0
    %196 = vmatprep.subr.mxu0 0.0
    %197 = vmatpush1.msra.mxu0 0.0
    %198 = vmatprep.subr.mxu0 0.0
    %199 = vmatpush1.msra.mxu0 0.0
    %200 = vmatprep.subr.mxu0 0.0
    %201 = vmatpush1.msra.mxu0 0.0
    %202 = vmatprep.subr.mxu0 0.0
    %203 = vmatpush1.msra.mxu0 0.0
    %204 = vmatprep.subr.mxu0 0.0
    %205 = vmatpush1.msra.mxu0 0.0
    %206 = vmatprep.subr.mxu0 0.0
    %207 = vmatpush1.msra.mxu0 0.0
    %208 = vmatprep.subr.mxu0 0.0
    %209 = vmatpush1.msra.mxu0 0.0
    %210 = vmatprep.subr.mxu0 0.0
    %211 = vmatpush1.msra.mxu0 0.0
    %212 = vmatprep.subr.mxu0 0.0
    %213 = vmatpush1.msra.mxu0 0.0
    %214 = vmatprep.subr.mxu0 0.0
    %215 = vmatpush1.msra.mxu0 0.0
    %216 = vmatprep.mubr.f32.mxu0 0.0
    %217 = vmatmul.mubr.f32.gmra.mrb[0].mxu0 %v150
    %v218 = vpop.f32.mrb[0].mxu0
    %v219 = vadd.f32 %v146, %v218
    %v220 = vpop.f32.mrb[0].mxu0
    %221 = vdwg.mxu0
    %v222 = vtanh.pop %v219
    %v223 = vld [vmem:[%s5] sm:$0xff]
    %v224 = vld [vmem:[%s6] sm:$0xff]
    %226 = vset.pattern.permute.xlu0 0
    %227 = vperm.xlu0 %226, %v224
    %v228 = vpop.permute.xlu0 %227
    %vm230 = vcmask 64512
    %v232 = vsel %vm230, %v223, 0
    %234 = vmatprep.subr.mxu0 0.0
    %235 = vmatpush1.msra.mxu0 %v222
    %236 = vmatprep.subr.mxu0 0.0
    %237 = vmatpush1.msra.mxu0 0.0
    %238 = vmatprep.subr.mxu0 0.0
    %239 = vmatpush1.msra.mxu0 0.0
    %240 = vmatprep.subr.mxu0 0.0
    %241 = vmatpush1.msra.mxu0 0.0
    %242 = vmatprep.subr.mxu0 0.0
    %243 = vmatpush1.msra.mxu0 0.0
    %244 = vmatprep.subr.mxu0 0.0
    %245 = vmatpush1.msra.mxu0 0.0
    %246 = vmatprep.subr.mxu0 0.0
    %247 = vmatpush1.msra.mxu0 0.0
    %248 = vmatprep.subr.mxu0 0.0
    %249 = vmatpush1.msra.mxu0 0.0
    %250 = vmatprep.subr.mxu0 0.0
    %251 = vmatpush1.msra.mxu0 0.0
    %252 = vmatprep.subr.mxu0 0.0
    %253 = vmatpush1.msra.mxu0 0.0
    %254 = vmatprep.subr.mxu0 0.0
    %255 = vmatpush1.msra.mxu0 0.0
    %256 = vmatprep.subr.mxu0 0.0
    %257 = vmatpush1.msra.mxu0 0.0
    %258 = vmatprep.subr.mxu0 0.0
    %259 = vmatpush1.msra.mxu0 0.0
    %260 = vmatprep.subr.mxu0 0.0
    %261 = vmatpush1.msra.mxu0 0.0
    %262 = vmatprep.subr.mxu0 0.0
    %263 = vmatpush1.msra.mxu0 0.0
    %264 = vmatprep.subr.mxu0 0.0
    %265 = vmatpush1.msra.mxu0 0.0
    %266 = vmatprep.subr.mxu0 0.0
    %267 = vmatpush1.msra.mxu0 0.0
    %268 = vmatprep.subr.mxu0 0.0
    %269 = vmatpush1.msra.mxu0 0.0
    %270 = vmatprep.subr.mxu0 0.0
    %271 = vmatpush1.msra.mxu0 0.0
    %272 = vmatprep.subr.mxu0 0.0
    %273 = vmatpush1.msra.mxu0 0.0
    %274 = vmatprep.subr.mxu0 0.0
    %275 = vmatpush1.msra.mxu0 0.0
    %276 = vmatprep.subr.mxu0 0.0
    %277 = vmatpush1.msra.mxu0 0.0
    %278 = vmatprep.subr.mxu0 0.0
    %279 = vmatpush1.msra.mxu0 0.0
    %280 = vmatprep.subr.mxu0 0.0
    %281 = vmatpush1.msra.mxu0 0.0
    %282 = vmatprep.subr.mxu0 0.0
    %283 = vmatpush1.msra.mxu0 0.0
    %284 = vmatprep.subr.mxu0 0.0
    %285 = vmatpush1.msra.mxu0 0.0
    %286 = vmatprep.subr.mxu0 0.0
    %287 = vmatpush1.msra.mxu0 0.0
    %288 = vmatprep.subr.mxu0 0.0
    %289 = vmatpush1.msra.mxu0 0.0
    %290 = vmatprep.subr.mxu0 0.0
    %291 = vmatpush1.msra.mxu0 0.0
    %292 = vmatprep.subr.mxu0 0.0
    %293 = vmatpush1.msra.mxu0 0.0
    %294 = vmatprep.subr.mxu0 0.0
    %295 = vmatpush1.msra.mxu0 0.0
    %296 = vmatprep.subr.mxu0 0.0
    %297 = vmatpush1.msra.mxu0 0.0
    %298 = vmatprep.mubr.f32.mxu0 0.0
    %299 = vmatmul.mubr.f32.gmra.mrb[0].mxu0 %v232
    %v300 = vpop.f32.mrb[0].mxu0
    %v301 = vadd.f32 %v228, %v300
    %v302 = vpop.f32.mrb[0].mxu0
    %303 = vdwg.mxu0
    %v304 = vtanh.pop %v301
    %v305 = vld [vmem:[%s7] sm:$0xff]
    %v306 = vld [vmem:[%s7 + $0x8] sm:$0xff]
    %v307 = vld [vmem:[%s8] sm:$0xff]
    %v308 = vld [vmem:[%s8 + $0x8] sm:$0xff]
    %310 = vset.pattern.permute.xlu0 0
    %311 = vperm.xlu0 %310, %v307
    %v312 = vpop.permute.xlu0 %311
    %315 = vset.pattern.permute.xlu0 0
    %316 = vperm.xlu0 %315, %v308
    %v317 = vpop.permute.xlu0 %316
    %v320 = vsel %vm230, %v305, 0
    %v323 = vsel %vm230, %v306, 0
    %325 = vmatprep.subr.mxu0 0.0
    %326 = vmatpush1.msra.mxu0 %v304
    %327 = vmatprep.subr.mxu0 0.0
    %328 = vmatpush1.msra.mxu0 0.0
    %329 = vmatprep.subr.mxu0 0.0
    %330 = vmatpush1.msra.mxu0 0.0
    %331 = vmatprep.subr.mxu0 0.0
    %332 = vmatpush1.msra.mxu0 0.0
    %333 = vmatprep.subr.mxu0 0.0
    %334 = vmatpush1.msra.mxu0 0.0
    %335 = vmatprep.subr.mxu0 0.0
    %336 = vmatpush1.msra.mxu0 0.0
    %337 = vmatprep.subr.mxu0 0.0
    %338 = vmatpush1.msra.mxu0 0.0
    %339 = vmatprep.subr.mxu0 0.0
    %340 = vmatpush1.msra.mxu0 0.0
    %341 = vmatprep.subr.mxu0 0.0
    %342 = vmatpush1.msra.mxu0 0.0
    %343 = vmatprep.subr.mxu0 0.0
    %344 = vmatpush1.msra.mxu0 0.0
    %345 = vmatprep.subr.mxu0 0.0
    %346 = vmatpush1.msra.mxu0 0.0
    %347 = vmatprep.subr.mxu0 0.0
    %348 = vmatpush1.msra.mxu0 0.0
    %349 = vmatprep.subr.mxu0 0.0
    %350 = vmatpush1.msra.mxu0 0.0
    %351 = vmatprep.subr.mxu0 0.0
    %352 = vmatpush1.msra.mxu0 0.0
    %353 = vmatprep.subr.mxu0 0.0
    %354 = vmatpush1.msra.mxu0 0.0
    %355 = vmatprep.subr.mxu0 0.0
    %356 = vmatpush1.msra.mxu0 0.0
    %357 = vmatprep.subr.mxu0 0.0
    %358 = vmatpush1.msra.mxu0 0.0
    %359 = vmatprep.subr.mxu0 0.0
    %360 = vmatpush1.msra.mxu0 0.0
    %361 = vmatprep.subr.mxu0 0.0
    %362 = vmatpush1.msra.mxu0 0.0
    %363 = vmatprep.subr.mxu0 0.0
    %364 = vmatpush1.msra.mxu0 0.0
    %365 = vmatprep.subr.mxu0 0.0
    %366 = vmatpush1.msra.mxu0 0.0
    %367 = vmatprep.subr.mxu0 0.0
    %368 = vmatpush1.msra.mxu0 0.0
    %369 = vmatprep.subr.mxu0 0.0
    %370 = vmatpush1.msra.mxu0 0.0
    %371 = vmatprep.subr.mxu0 0.0
    %372 = vmatpush1.msra.mxu0 0.0
    %373 = vmatprep.subr.mxu0 0.0
    %374 = vmatpush1.msra.mxu0 0.0
    %375 = vmatprep.subr.mxu0 0.0
    %376 = vmatpush1.msra.mxu0 0.0
    %377 = vmatprep.subr.mxu0 0.0
    %378 = vmatpush1.msra.mxu0 0.0
    %379 = vmatprep.subr.mxu0 0.0
    %380 = vmatpush1.msra.mxu0 0.0
    %381 = vmatprep.subr.mxu0 0.0
    %382 = vmatpush1.msra.mxu0 0.0
    %383 = vmatprep.subr.mxu0 0.0
    %384 = vmatpush1.msra.mxu0 0.0
    %385 = vmatprep.subr.mxu0 0.0
    %386 = vmatpush1.msra.mxu0 0.0
    %387 = vmatprep.subr.mxu0 0.0
    %388 = vmatpush1.msra.mxu0 0.0
    %389 = vmatprep.mubr.f32.mxu0 0.0
    %390 = vmatmul.mubr.f32.gmra.mrb[0].mxu0 %v320
    %v391 = vpop.f32.mrb[0].mxu0
    %v392 = vadd.f32 %v312, %v391
    %v393 = vpop.f32.mrb[0].mxu0
    %394 = vmatprep.mubr.f32.mxu0 0.0
    %395 = vmatmul.mubr.f32.gmra.mrb[0].mxu0 %v323
    %v396 = vpop.f32.mrb[0].mxu0
    %v397 = vadd.f32 %v317, %v396
    %v398 = vpop.f32.mrb[0].mxu0
    %399 = vdwg.mxu0
    %v400 = vtanh.pop %v392
    %v401 = vtanh.pop %v397
    %v402 = vld [vmem:[%s9] sm:$0xff]
    %v403 = vld [vmem:[%s9 + $0x8] sm:$0xff]
    %v404 = vld [vmem:[%s9 + $0x10] sm:$0xff]
    %v405 = vld [vmem:[%s9 + $0x18] sm:$0xff]
    %v406 = vld [vmem:[%s10] sm:$0xff]
    %v407 = vld [vmem:[%s10 + $0x8] sm:$0xff]
    %v408 = vld [vmem:[%s10 + $0x10] sm:$0xff]
    %v409 = vld [vmem:[%s10 + $0x18] sm:$0xff]
    %411 = vset.pattern.permute.xlu0 0
    %412 = vperm.xlu0 %411, %v406
    %v413 = vpop.permute.xlu0 %412
    %416 = vset.pattern.permute.xlu0 0
    %417 = vperm.xlu0 %416, %v407
    %v418 = vpop.permute.xlu0 %417
    %421 = vset.pattern.permute.xlu0 0
    %422 = vperm.xlu0 %421, %v408
    %v423 = vpop.permute.xlu0 %422
    %426 = vset.pattern.permute.xlu0 0
    %427 = vperm.xlu0 %426, %v409
    %v428 = vpop.permute.xlu0 %427
    %v431 = vsel %vm148, %v402, 0
    %v434 = vsel %vm148, %v403, 0
    %v437 = vsel %vm148, %v404, 0
    %v440 = vsel %vm148, %v405, 0
    %442 = vmatprep.subr.mxu0 0.0
    %443 = vmatpush1.msra.mxu0 %v400
    %444 = vmatprep.subr.mxu0 0.0
    %445 = vmatpush1.msra.mxu0 %v401
    %446 = vmatprep.subr.mxu0 0.0
    %447 = vmatpush1.msra.mxu0 0.0
    %448 = vmatprep.subr.mxu0 0.0
    %449 = vmatpush1.msra.mxu0 0.0
    %450 = vmatprep.subr.mxu0 0.0
    %451 = vmatpush1.msra.mxu0 0.0
    %452 = vmatprep.subr.mxu0 0.0
    %453 = vmatpush1.msra.mxu0 0.0
    %454 = vmatprep.subr.mxu0 0.0
    %455 = vmatpush1.msra.mxu0 0.0
    %456 = vmatprep.subr.mxu0 0.0
    %457 = vmatpush1.msra.mxu0 0.0
    %458 = vmatprep.subr.mxu0 0.0
    %459 = vmatpush1.msra.mxu0 0.0
    %460 = vmatprep.subr.mxu0 0.0
    %461 = vmatpush1.msra.mxu0 0.0
    %462 = vmatprep.subr.mxu0 0.0
    %463 = vmatpush1.msra.mxu0 0.0
    %464 = vmatprep.subr.mxu0 0.0
    %465 = vmatpush1.msra.mxu0 0.0
    %466 = vmatprep.subr.mxu0 0.0
    %467 = vmatpush1.msra.mxu0 0.0
    %468 = vmatprep.subr.mxu0 0.0
    %469 = vmatpush1.msra.mxu0 0.0
    %470 = vmatprep.subr.mxu0 0.0
    %471 = vmatpush1.msra.mxu0 0.0
    %472 = vmatprep.subr.mxu0 0.0
    %473 = vmatpush1.msra.mxu0 0.0
    %474 = vmatprep.subr.mxu0 0.0
    %475 = vmatpush1.msra.mxu0 0.0
    %476 = vmatprep.subr.mxu0 0.0
    %477 = vmatpush1.msra.mxu0 0.0
    %478 = vmatprep.subr.mxu0 0.0
    %479 = vmatpush1.msra.mxu0 0.0
    %480 = vmatprep.subr.mxu0 0.0
    %481 = vmatpush1.msra.mxu0 0.0
    %482 = vmatprep.subr.mxu0 0.0
    %483 = vmatpush1.msra.mxu0 0.0
    %484 = vmatprep.subr.mxu0 0.0
    %485 = vmatpush1.msra.mxu0 0.0
    %486 = vmatprep.subr.mxu0 0.0
    %487 = vmatpush1.msra.mxu0 0.0
    %488 = vmatprep.subr.mxu0 0.0
    %489 = vmatpush1.msra.mxu0 0.0
    %490 = vmatprep.subr.mxu0 0.0
    %491 = vmatpush1.msra.mxu0 0.0
    %492 = vmatprep.subr.mxu0 0.0
    %493 = vmatpush1.msra.mxu0 0.0
    %494 = vmatprep.subr.mxu0 0.0
    %495 = vmatpush1.msra.mxu0 0.0
    %496 = vmatprep.subr.mxu0 0.0
    %497 = vmatpush1.msra.mxu0 0.0
    %498 = vmatprep.subr.mxu0 0.0
    %499 = vmatpush1.msra.mxu0 0.0
    %500 = vmatprep.subr.mxu0 0.0
    %501 = vmatpush1.msra.mxu0 0.0
    %502 = vmatprep.subr.mxu0 0.0
    %503 = vmatpush1.msra.mxu0 0.0
    %504 = vmatprep.subr.mxu0 0.0
    %505 = vmatpush1.msra.mxu0 0.0
    %506 = vmatprep.mubr.f32.mxu0 0.0
    %507 = vmatmul.mubr.f32.gmra.mrb[0].mxu0 %v431
    %v508 = vpop.f32.mrb[0].mxu0
    %v509 = vadd.f32 %v413, %v508
    %v510 = vpop.f32.mrb[0].mxu0
    %511 = vmatprep.mubr.f32.mxu0 0.0
    %512 = vmatmul.mubr.f32.gmra.mrb[0].mxu0 %v434
    %v513 = vpop.f32.mrb[0].mxu0
    %v514 = vadd.f32 %v418, %v513
    %v515 = vpop.f32.mrb[0].mxu0
    %516 = vmatprep.mubr.f32.mxu0 0.0
    %517 = vmatmul.mubr.f32.gmra.mrb[0].mxu0 %v437
    %v518 = vpop.f32.mrb[0].mxu0
    %v519 = vadd.f32 %v423, %v518
    %v520 = vpop.f32.mrb[0].mxu0
    %521 = vmatprep.mubr.f32.mxu0 0.0
    %522 = vmatmul.mubr.f32.gmra.mrb[0].mxu0 %v440
    %v523 = vpop.f32.mrb[0].mxu0
    %v524 = vadd.f32 %v428, %v523
    %v525 = vpop.f32.mrb[0].mxu0
    %526 = vdwg.mxu0
    %527 = vst [vmem:[#allocation2] sm:$0xff] %v509
    %528 = vst [vmem:[#allocation2 + $0x8] sm:$0xff] %v514
    %529 = vst [vmem:[#allocation2 + $0x10] sm:$0xff] %v519
    %530 = vst [vmem:[#allocation2 + $0x18] sm:$0xff] %v524
    // Predicated region
    $region46: #{tpu_custom_call.1} parent=1 // pred_check
      _
    $region47: #{tpu_custom_call.1} parent=1 // pred_check_branch
      %532 = sbr.rel (0) target = $region49
    $region48: #{tpu_custom_call.1} parent=1 // pred_region
      %s534 = ssub.s32 512, 512
      %535 = vsyncadd [#allocation3], %s534
      %s536 = sshll.u32 [#allocation2], 4
      %s537 = int_to_ptr.vmem [resolvable:$true] %s536
      %542 = dma.vmem_to_hbm [thread:$0]  %s537, 512, %s11, [#allocation3], 128, 128, 8
    $region49: #{tpu_custom_call.1} parent=1 // pred_fallthru
      _
    // Predicated region
    $region50: #{tpu_custom_call.1} parent=1 // pred_check
      _
    $region51: #{tpu_custom_call.1} parent=1 // pred_check_branch
      %544 = sbr.rel (0) target = $region53
    $region52: #{tpu_custom_call.1} parent=1 // pred_region
      %545 = dma.done [#allocation3], 512
    $region53: #{tpu_custom_call.1} parent=1 // pred_fallthru
      _
    %546 = vsyncpa [#allocation3], 1

</llo_original>
